<compile_context>
chip_gen: v6e
topology: v6e:2x2x1
jax: 0.10.0
libtpu: 0.0.40
codegen_flags: <defaults>
</compile_context>

<pallas_src>
import jax
import jax.numpy as jnp
from jax.experimental import pallas as pl
from jax.experimental.pallas import tpu as pltpu


def _local_affine_kernel(w_ref, x_ref, o_ref):
    # w_ref: (12, TR, 128)  rows 0..8 = A (row-major 3x3), rows 9..11 = bias
    # x_ref: (3, TR, 128), o_ref: (3, TR, 128)
    x0 = x_ref[0]
    x1 = x_ref[1]
    x2 = x_ref[2]
    w = w_ref[...]
    o_ref[0] = (w[0] * x0 + w[1] * x1 + w[2] * x2 + w[9]).astype(o_ref.dtype)
    o_ref[1] = (w[3] * x0 + w[4] * x1 + w[5] * x2 + w[10]).astype(o_ref.dtype)
    o_ref[2] = (w[6] * x0 + w[7] * x1 + w[8] * x2 + w[11]).astype(o_ref.dtype)


def _round_up(x, m):
    return ((x + m - 1) // m) * m


def choose_tile_r(total_points, *, max_points_per_step=65536, min_grid=4):
    """Pick tile_r (number of 128-point rows per grid step), a multiple of 8.

    Largest tile <= max_points_per_step that still keeps >= min_grid grid
    steps when the input is large enough (so v7x's two TensorCores each get
    a few steps to pipeline); floors at 8 rows (1024 points) for tiny inputs.
    """
    rows = pl.cdiv(total_points, 128)
    max_tile_r = max(8, max_points_per_step // 128)
    tile_r = max(1, min(max_tile_r, rows // min_grid))
    tile_r = max(8, (tile_r // 8) * 8)
    return tile_r


def init_local_affine_params(batch_size, num_points, *, tile_r, dtype=jnp.float32):
    """Matches LocalAffine.__init__ (A = identity, b = zeros) but stores the
    fused parameters directly in kernel layout, padded to a multiple of
    (tile_r * 128) points:
      W_k: (12, R, 128) with, for flat point index p = r*128 + l = b*N + n,
        W_k[3*i + j, r, l] == A[b, n, i, j]
        W_k[9 + i,  r, l] == b[b, n, i, 0]
    """
    total = batch_size * num_points
    P = _round_up(total, tile_r * 128)
    R = P // 128
    W_k = jnp.zeros((12, R, 128), dtype=dtype).at[jnp.array([0, 4, 8])].set(1.0)
    return W_k


def kernel_params_to_dense(W_k, batch_size, num_points):
    """Convert kernel-layout params back to the PyTorch layout (for checks)."""
    total = batch_size * num_points
    R = W_k.shape[1]
    flat = W_k.reshape(12, R * 128)[:, :total]               # (12, total)
    A = jnp.transpose(flat[:9], (1, 0)).reshape(batch_size, num_points, 3, 3)
    b = jnp.transpose(flat[9:], (1, 0)).reshape(batch_size, num_points, 3, 1)
    return A, b


def local_affine_apply_kernel_layout(W_k, x_k, *, tile_r):
    """Core kernel call in kernel layout.

    W_k: (12, R, 128), x_k: (3, R, 128) -> (3, R, 128).
    Use this directly (keeping activations in kernel layout) when LocalAffine
    is applied iteratively, to avoid per-call layout shuffles in HBM.
    """
    R = W_k.shape[1]
    assert W_k.shape == (12, R, 128)
    assert x_k.shape == (3, R, 128)
    assert R % tile_r == 0

    return pl.pallas_call(
        _local_affine_kernel,
        out_shape=jax.ShapeDtypeStruct((3, R, 128), x_k.dtype),
        grid_spec=pl.GridSpec(
            grid=(R // tile_r,),
            in_specs=[
                pl.BlockSpec((12, tile_r, 128), lambda i: (0, i, 0)),
                pl.BlockSpec((3, tile_r, 128), lambda i: (0, i, 0)),
            ],
            out_specs=pl.BlockSpec((3, tile_r, 128), lambda i: (0, i, 0)),
        ),
        compiler_params=pltpu.CompilerParams(
            dimension_semantics=("parallel",),
        ),
    )(W_k, x_k)


def local_affine_forward(W_k, x, *, tile_r):
    """PyTorch-layout interface: x: (B, N, 3) -> (B, N, 3).

    W_k must have been created with the same tile_r (so its padded point count
    P = W_k.shape[1] * 128 is a multiple of tile_r * 128 and covers B*N).
    The x/out relayout below is an extra HBM pass; prefer the kernel-layout
    entry point above for repeated application.
    """
    B, N, _ = x.shape
    total = B * N
    R = W_k.shape[1]
    P = R * 128
    assert P >= total and R % tile_r == 0

    x_flat = x.reshape(total, 3)
    if P > total:
        x_flat = jnp.pad(x_flat, ((0, P - total), (0, 0)))
    x_k = jnp.transpose(x_flat, (1, 0)).reshape(3, R, 128)   # (3, R, 128)

    out_k = local_affine_apply_kernel_layout(W_k, x_k, tile_r=tile_r)

    out = jnp.transpose(out_k.reshape(3, P), (1, 0))[:total]
    return out.reshape(B, N, 3)


# TODO(synk): stiffness() (edge index_select + Frobenius diff + det rigidity)
# is only used when return_stiff=True; not part of the default forward path,
# so it is not kernelized here.


if __name__ == "__main__":
    key = jax.random.PRNGKey(0)
    k_w, k_x = jax.random.split(key, 2)

    batch_size, num_points = 2, 256
    total = batch_size * num_points
    tile_r = choose_tile_r(total)            # -> 8 rows (1024 points), 1 step

    # Identity / zero init (as in the PyTorch module), then perturb so the
    # correctness check exercises a non-trivial affine transform.
    W_k = init_local_affine_params(batch_size, num_points, tile_r=tile_r)
    W_k = W_k + 0.1 * jax.random.normal(k_w, W_k.shape, dtype=W_k.dtype)

    x = jax.random.normal(k_x, (batch_size, num_points, 3), dtype=jnp.float32)

    out = jax.block_until_ready(local_affine_forward(W_k, x, tile_r=tile_r))

    # Plain-JAX reference in the original PyTorch layout.
    A, b = kernel_params_to_dense(W_k, batch_size, num_points)
    ref = jnp.einsum("bnij,bnj->bni", A, x) + b[..., 0]
    assert out.shape == (batch_size, num_points, 3)
    assert jnp.allclose(out, ref, atol=1e-5, rtol=1e-5)

    print("KERNEL_OK")
</pallas_src>

<mosaic_0001>
module attributes {stable_mosaic.version = 11 : i64} {
  func.func @_local_affine_kernel(%arg0: i32, %arg1: memref<12x8x128xf32, #tpu.memory_space<vmem>>, %arg2: memref<3x8x128xf32, #tpu.memory_space<vmem>>, %arg3: memref<3x8x128xf32, #tpu.memory_space<vmem>>) attributes {dimension_semantics = [#tpu.dimension_semantics<parallel>], iteration_bounds = array<i64: 1>, scalar_prefetch = 0 : i64, scratch_operands = 0 : i64, tpu.core_type = #tpu.core_type<tc>, window_params = [{transform_indices = @transform_0, window_bounds = array<i64: 12, 8, 128>}, {transform_indices = @transform_1, window_bounds = array<i64: 3, 8, 128>}, {transform_indices = @transform_2, window_bounds = array<i64: 3, 8, 128>}]} {
    %c0 = arith.constant 0 : index
    %c0_0 = arith.constant 0 : index
    %c0_1 = arith.constant 0 : index
    %0 = vector.load %arg2[%c0, %c0_0, %c0_1] : memref<3x8x128xf32, #tpu.memory_space<vmem>>, vector<1x8x128xf32>
    %1 = vector.shape_cast %0 : vector<1x8x128xf32> to vector<8x128xf32>
    %c1 = arith.constant 1 : index
    %c0_2 = arith.constant 0 : index
    %c0_3 = arith.constant 0 : index
    %2 = vector.load %arg2[%c1, %c0_2, %c0_3] : memref<3x8x128xf32, #tpu.memory_space<vmem>>, vector<1x8x128xf32>
    %3 = vector.shape_cast %2 : vector<1x8x128xf32> to vector<8x128xf32>
    %c2 = arith.constant 2 : index
    %c0_4 = arith.constant 0 : index
    %c0_5 = arith.constant 0 : index
    %4 = vector.load %arg2[%c2, %c0_4, %c0_5] : memref<3x8x128xf32, #tpu.memory_space<vmem>>, vector<1x8x128xf32>
    %5 = vector.shape_cast %4 : vector<1x8x128xf32> to vector<8x128xf32>
    %c0_6 = arith.constant 0 : index
    %c0_7 = arith.constant 0 : index
    %c0_8 = arith.constant 0 : index
    %6 = vector.load %arg1[%c0_6, %c0_7, %c0_8] : memref<12x8x128xf32, #tpu.memory_space<vmem>>, vector<12x8x128xf32>
    %7 = vector.extract_strided_slice %6 {offsets = [0, 0, 0], sizes = [1, 8, 128], strides = [1, 1, 1]} : vector<12x8x128xf32> to vector<1x8x128xf32>
    %8 = vector.shape_cast %7 : vector<1x8x128xf32> to vector<8x128xf32>
    %9 = arith.mulf %8, %1 : vector<8x128xf32>
    %10 = vector.extract_strided_slice %6 {offsets = [1, 0, 0], sizes = [1, 8, 128], strides = [1, 1, 1]} : vector<12x8x128xf32> to vector<1x8x128xf32>
    %11 = vector.shape_cast %10 : vector<1x8x128xf32> to vector<8x128xf32>
    %12 = arith.mulf %11, %3 : vector<8x128xf32>
    %13 = arith.addf %9, %12 : vector<8x128xf32>
    %14 = vector.extract_strided_slice %6 {offsets = [2, 0, 0], sizes = [1, 8, 128], strides = [1, 1, 1]} : vector<12x8x128xf32> to vector<1x8x128xf32>
    %15 = vector.shape_cast %14 : vector<1x8x128xf32> to vector<8x128xf32>
    %16 = arith.mulf %15, %5 : vector<8x128xf32>
    %17 = arith.addf %13, %16 : vector<8x128xf32>
    %18 = vector.extract_strided_slice %6 {offsets = [9, 0, 0], sizes = [1, 8, 128], strides = [1, 1, 1]} : vector<12x8x128xf32> to vector<1x8x128xf32>
    %19 = vector.shape_cast %18 : vector<1x8x128xf32> to vector<8x128xf32>
    %20 = arith.addf %17, %19 : vector<8x128xf32>
    %c0_9 = arith.constant 0 : index
    %c0_10 = arith.constant 0 : index
    %c0_11 = arith.constant 0 : index
    %21 = vector.load %arg3[%c0_9, %c0_10, %c0_11] : memref<3x8x128xf32, #tpu.memory_space<vmem>>, vector<1x8x128xf32>
    %22 = vector.shape_cast %21 : vector<1x8x128xf32> to vector<8x128xf32>
    %23 = vector.shape_cast %20 : vector<8x128xf32> to vector<1x8x128xf32>
    tpu.vector_store %arg3[%c0_9, %c0_10, %c0_11], %23 {strides = array<i32>} : memref<3x8x128xf32, #tpu.memory_space<vmem>>, vector<1x8x128xf32>,
    %24 = vector.extract_strided_slice %6 {offsets = [3, 0, 0], sizes = [1, 8, 128], strides = [1, 1, 1]} : vector<12x8x128xf32> to vector<1x8x128xf32>
    %25 = vector.shape_cast %24 : vector<1x8x128xf32> to vector<8x128xf32>
    %26 = arith.mulf %25, %1 : vector<8x128xf32>
    %27 = vector.extract_strided_slice %6 {offsets = [4, 0, 0], sizes = [1, 8, 128], strides = [1, 1, 1]} : vector<12x8x128xf32> to vector<1x8x128xf32>
    %28 = vector.shape_cast %27 : vector<1x8x128xf32> to vector<8x128xf32>
    %29 = arith.mulf %28, %3 : vector<8x128xf32>
    %30 = arith.addf %26, %29 : vector<8x128xf32>
    %31 = vector.extract_strided_slice %6 {offsets = [5, 0, 0], sizes = [1, 8, 128], strides = [1, 1, 1]} : vector<12x8x128xf32> to vector<1x8x128xf32>
    %32 = vector.shape_cast %31 : vector<1x8x128xf32> to vector<8x128xf32>
    %33 = arith.mulf %32, %5 : vector<8x128xf32>
    %34 = arith.addf %30, %33 : vector<8x128xf32>
    %35 = vector.extract_strided_slice %6 {offsets = [10, 0, 0], sizes = [1, 8, 128], strides = [1, 1, 1]} : vector<12x8x128xf32> to vector<1x8x128xf32>
    %36 = vector.shape_cast %35 : vector<1x8x128xf32> to vector<8x128xf32>
    %37 = arith.addf %34, %36 : vector<8x128xf32>
    %c1_12 = arith.constant 1 : index
    %c0_13 = arith.constant 0 : index
    %c0_14 = arith.constant 0 : index
    %38 = vector.load %arg3[%c1_12, %c0_13, %c0_14] : memref<3x8x128xf32, #tpu.memory_space<vmem>>, vector<1x8x128xf32>
    %39 = vector.shape_cast %38 : vector<1x8x128xf32> to vector<8x128xf32>
    %40 = vector.shape_cast %37 : vector<8x128xf32> to vector<1x8x128xf32>
    tpu.vector_store %arg3[%c1_12, %c0_13, %c0_14], %40 {strides = array<i32>} : memref<3x8x128xf32, #tpu.memory_space<vmem>>, vector<1x8x128xf32>,
    %41 = vector.extract_strided_slice %6 {offsets = [6, 0, 0], sizes = [1, 8, 128], strides = [1, 1, 1]} : vector<12x8x128xf32> to vector<1x8x128xf32>
    %42 = vector.shape_cast %41 : vector<1x8x128xf32> to vector<8x128xf32>
    %43 = arith.mulf %42, %1 : vector<8x128xf32>
    %44 = vector.extract_strided_slice %6 {offsets = [7, 0, 0], sizes = [1, 8, 128], strides = [1, 1, 1]} : vector<12x8x128xf32> to vector<1x8x128xf32>
    %45 = vector.shape_cast %44 : vector<1x8x128xf32> to vector<8x128xf32>
    %46 = arith.mulf %45, %3 : vector<8x128xf32>
    %47 = arith.addf %43, %46 : vector<8x128xf32>
    %48 = vector.extract_strided_slice %6 {offsets = [8, 0, 0], sizes = [1, 8, 128], strides = [1, 1, 1]} : vector<12x8x128xf32> to vector<1x8x128xf32>
    %49 = vector.shape_cast %48 : vector<1x8x128xf32> to vector<8x128xf32>
    %50 = arith.mulf %49, %5 : vector<8x128xf32>
    %51 = arith.addf %47, %50 : vector<8x128xf32>
    %52 = vector.extract_strided_slice %6 {offsets = [11, 0, 0], sizes = [1, 8, 128], strides = [1, 1, 1]} : vector<12x8x128xf32> to vector<1x8x128xf32>
    %53 = vector.shape_cast %52 : vector<1x8x128xf32> to vector<8x128xf32>
    %54 = arith.addf %51, %53 : vector<8x128xf32>
    %c2_15 = arith.constant 2 : index
    %c0_16 = arith.constant 0 : index
    %c0_17 = arith.constant 0 : index
    %55 = vector.load %arg3[%c2_15, %c0_16, %c0_17] : memref<3x8x128xf32, #tpu.memory_space<vmem>>, vector<1x8x128xf32>
    %56 = vector.shape_cast %55 : vector<1x8x128xf32> to vector<8x128xf32>
    %57 = vector.shape_cast %54 : vector<8x128xf32> to vector<1x8x128xf32>
    tpu.vector_store %arg3[%c2_15, %c0_16, %c0_17], %57 {strides = array<i32>} : memref<3x8x128xf32, #tpu.memory_space<vmem>>, vector<1x8x128xf32>,
    return
  }
  func.func @transform_0(%arg0: i32) -> (i32, i32, i32) {
    %c0_i32 = arith.constant 0 : i32
    %c0_i32_0 = arith.constant 0 : i32
    %c0_i32_1 = arith.constant 0 : i32
    return %c0_i32, %arg0, %c0_i32_0 : i32, i32, i32
  }
  func.func @transform_1(%arg0: i32) -> (i32, i32, i32) {
    %c0_i32 = arith.constant 0 : i32
    %c0_i32_0 = arith.constant 0 : i32
    %c0_i32_1 = arith.constant 0 : i32
    return %c0_i32, %arg0, %c0_i32_0 : i32, i32, i32
  }
  func.func @transform_2(%arg0: i32) -> (i32, i32, i32) {
    %c0_i32 = arith.constant 0 : i32
    %c0_i32_0 = arith.constant 0 : i32
    %c0_i32_1 = arith.constant 0 : i32
    return %c0_i32, %arg0, %c0_i32_0 : i32, i32, i32
  }
}

</mosaic_0001>

<llo_original>
// kernel: tpu_custom_call.1
$region0: #{tpu_custom_call.1}
  #allocation0 [shape = 'u32[]', space=smem, size = 0x4, offset = 0x4, fixed_abs, tag = 'smem constant byte address 0x4 - core index']
  #allocation1 [shape = 'u32[144,128]{1,0:T(1,128)}', space=vmem, size = 0x12000, scoped, tag = 'internal scratch']
  %s0 = inlined_call_operand.hbm [shape: f32[12,8,128], index: 0, kind: input, shape index: {}]
  %s1 = inlined_call_operand.hbm [shape: f32[3,8,128], index: 1, kind: input, shape index: {}]
  %s2 = inlined_call_operand.hbm [shape: f32[3,8,128], index: 2, kind: output, shape index: {}]
  %s3 = sld [smem:[#allocation0]]
  $region26: #{tpu_custom_call.1} parent=0
    _
  %s5 = ssub.s32 1, %s3
  %s6 = scalar_select 0, %s5, %s3
  $region1: #{tpu_custom_call.1} parent=0
    #allocation2 [shape = 'u8[49152]{0}', space=vmem, size = 0xc000, scoped, tag = 'input window, operand 0, single buffered']
    #allocation3 [shape = 's32[1]{0}', space=sflag, size = 0x4, scoped, tag = 'scoped memory for tpu_custom_call.1']
    #allocation4 [shape = 's32[1]{0}', space=sflag, size = 0x4, scoped, tag = 'scoped memory for tpu_custom_call.1']
    #allocation5 [shape = 'u8[12288]{0}', space=vmem, size = 0x3000, scoped, tag = 'input window, operand 1, single buffered']
    #allocation6 [shape = 's32[1]{0}', space=sflag, size = 0x4, scoped, tag = 'scoped memory for tpu_custom_call.1']
    #allocation7 [shape = 'u8[12288]{0}', space=vmem, size = 0x3000, scoped, tag = 'output window, operand 0, single buffered']
    %7 = vsyncpa [#allocation3], 0
    %8 = vsyncpa [#allocation6], 0
    %9 = vsyncpa [#allocation4], 0
    // Predicated region
    $region2: #{tpu_custom_call.1} parent=1 // pred_check
      _
    $region3: #{tpu_custom_call.1} parent=1 // pred_check_branch
      %11 = sbr.rel (0) target = $region5
    $region4: #{tpu_custom_call.1} parent=1 // pred_region
      %s13 = ssub.s32 1536, 1536
      %14 = vsyncadd [#allocation3], %s13
      %s15 = sshll.u32 [#allocation2], 4
      %s16 = int_to_ptr.vmem [resolvable:$true] %s15
      %21 = dma.hbm_to_vmem [thread:$0]  %s0, 1536, %s16, [#allocation3], 128, 128, 8
    $region5: #{tpu_custom_call.1} parent=1 // pred_fallthru
      _
    // Predicated region
    $region6: #{tpu_custom_call.1} parent=1 // pred_check
      _
    $region7: #{tpu_custom_call.1} parent=1 // pred_check_branch
      %23 = sbr.rel (0) target = $region9
    $region8: #{tpu_custom_call.1} parent=1 // pred_region
      %s25 = ssub.s32 384, 384
      %26 = vsyncadd [#allocation6], %s25
      %s27 = sshll.u32 [#allocation5], 4
      %s28 = int_to_ptr.vmem [resolvable:$true] %s27
      %33 = dma.hbm_to_vmem [thread:$0]  %s1, 384, %s28, [#allocation6], 128, 128, 8
    $region9: #{tpu_custom_call.1} parent=1 // pred_fallthru
      _
    // Predicated region
    $region10: #{tpu_custom_call.1} parent=1 // pred_check
      _
    $region11: #{tpu_custom_call.1} parent=1 // pred_check_branch
      %35 = sbr.rel (0) target = $region13
    $region12: #{tpu_custom_call.1} parent=1 // pred_region
      %36 = dma.done [#allocation3], 1536
    $region13: #{tpu_custom_call.1} parent=1 // pred_fallthru
      _
    // Predicated region
    $region14: #{tpu_custom_call.1} parent=1 // pred_check
      _
    $region15: #{tpu_custom_call.1} parent=1 // pred_check_branch
      %38 = sbr.rel (0) target = $region17
    $region16: #{tpu_custom_call.1} parent=1 // pred_region
      %39 = dma.done [#allocation6], 384
    $region17: #{tpu_custom_call.1} parent=1 // pred_fallthru
      _
    %v40 = vld [vmem:[#allocation5] sm:$0xff]
    %s41 = scalar_lea.vmem [#allocation5], 8
    %v42 = vld [vmem:[%s41] sm:$0xff]
    %s43 = scalar_lea.vmem [#allocation5], 16
    %v44 = vld [vmem:[%s43] sm:$0xff]
    %v45 = vld [vmem:[#allocation2] sm:$0xff]
    %v46 = vld [vmem:[#allocation2 + $0x8] sm:$0xff]
    %v47 = vld [vmem:[#allocation2 + $0x10] sm:$0xff]
    %v48 = vld [vmem:[#allocation2 + $0x18] sm:$0xff]
    %v49 = vld [vmem:[#allocation2 + $0x20] sm:$0xff]
    %v50 = vld [vmem:[#allocation2 + $0x28] sm:$0xff]
    %v51 = vld [vmem:[#allocation2 + $0x30] sm:$0xff]
    %v52 = vld [vmem:[#allocation2 + $0x38] sm:$0xff]
    %v53 = vld [vmem:[#allocation2 + $0x40] sm:$0xff]
    %v54 = vld [vmem:[#allocation2 + $0x48] sm:$0xff]
    %v55 = vld [vmem:[#allocation2 + $0x50] sm:$0xff]
    %v56 = vld [vmem:[#allocation2 + $0x58] sm:$0xff]
    %v57 = vmul.f32 %v45, %v40
    %v58 = vmul.f32 %v46, %v42
    %v59 = vadd.f32 %v57, %v58
    %v60 = vmul.f32 %v47, %v44
    %v61 = vadd.f32 %v59, %v60
    %v62 = vadd.f32 %v61, %v54
    %63 = vst [vmem:[#allocation7] sm:$0xff] %v62
    %v64 = vmul.f32 %v48, %v40
    %v65 = vmul.f32 %v49, %v42
    %v66 = vadd.f32 %v64, %v65
    %v67 = vmul.f32 %v50, %v44
    %v68 = vadd.f32 %v66, %v67
    %v69 = vadd.f32 %v68, %v55
    %s70 = scalar_lea.vmem [#allocation7], 8
    %71 = vst [vmem:[%s70] sm:$0xff] %v69
    %v72 = vmul.f32 %v51, %v40
    %v73 = vmul.f32 %v52, %v42
    %v74 = vadd.f32 %v72, %v73
    %v75 = vmul.f32 %v53, %v44
    %v76 = vadd.f32 %v74, %v75
    %v77 = vadd.f32 %v76, %v56
    %s78 = scalar_lea.vmem [#allocation7], 16
    %79 = vst [vmem:[%s78] sm:$0xff] %v77
    // Predicated region
    $region18: #{tpu_custom_call.1} parent=1 // pred_check
      _
    $region19: #{tpu_custom_call.1} parent=1 // pred_check_branch
      %81 = sbr.rel (0) target = $region21
    $region20: #{tpu_custom_call.1} parent=1 // pred_region
      %s83 = ssub.s32 384, 384
      %84 = vsyncadd [#allocation4], %s83
      %s85 = sshll.u32 [#allocation7], 4
      %s86 = int_to_ptr.vmem [resolvable:$true] %s85
      %91 = dma.vmem_to_hbm [thread:$0]  %s86, 384, %s2, [#allocation4], 128, 128, 8
    $region21: #{tpu_custom_call.1} parent=1 // pred_fallthru
      _
    // Predicated region
    $region22: #{tpu_custom_call.1} parent=1 // pred_check
      _
    $region23: #{tpu_custom_call.1} parent=1 // pred_check_branch
      %93 = sbr.rel (0) target = $region25
    $region24: #{tpu_custom_call.1} parent=1 // pred_region
      %94 = dma.done [#allocation4], 384
    $region25: #{tpu_custom_call.1} parent=1 // pred_fallthru
      _
    %95 = vsyncpa [#allocation3], 1
    %96 = vsyncpa [#allocation6], 1
    %97 = vsyncpa [#allocation4], 1

</llo_original>
